<compile_context>
chip_gen: v6e
topology: v6e:2x2x1
jax: 0.10.0
libtpu: 0.0.40
codegen_flags: <defaults>
</compile_context>

<pallas_src>
import jax
import jax.numpy as jnp
from jax.experimental import pallas as pl
from jax.experimental.pallas import tpu as pltpu


def _linear_kernel(x_ref, p_ref, o_ref):
    # x_ref: [1, N] in VMEM (lane-dense). p_ref: f32[2] = [w, b] in SMEM.
    w = p_ref[0]
    b = p_ref[1]
    o_ref[...] = x_ref[...] * w + b


def linear_1x1(x, weight, bias):
    """y = x @ weight.T + bias for weight [1,1], bias [1]; x [N,1] -> [N,1]."""
    n, f_in = x.shape
    assert f_in == 1 and weight.shape == (1, 1) and bias.shape == (1,)

    # Lane-dense presentation: contiguous [N,1] -> [1,N] is reshape-only.
    x_row = x.reshape(1, n)
    # Single 1-D scalar operand [w, b] for SMEM (tiny, cheap to stage).
    params = jnp.concatenate([weight.reshape(1), bias.reshape(1)]).astype(x.dtype)

    out_row = pl.pallas_call(
        _linear_kernel,
        out_shape=jax.ShapeDtypeStruct((1, n), x.dtype),
        grid_spec=pl.GridSpec(
            grid=(1,),
            in_specs=[
                # Full-array block (block_shape == array shape), lane-dense.
                pl.BlockSpec((1, n), lambda i: (0, 0)),
                pl.BlockSpec(memory_space=pltpu.MemorySpace.SMEM),
            ],
            out_specs=pl.BlockSpec((1, n), lambda i: (0, 0)),
        ),
    )(x_row, params)

    return out_row.reshape(n, 1)


if __name__ == "__main__":
    key = jax.random.PRNGKey(0)
    kx, kw, kb = jax.random.split(key, 3)

    # Input matching the PyTorch script: x = torch.rand([50, 1])
    x = jax.random.uniform(kx, (50, 1), dtype=jnp.float32)

    # Deterministic parameter init mimicking nn.Linear(1, 1):
    # U(-1/sqrt(fan_in), 1/sqrt(fan_in)) with fan_in = 1.
    weight = jax.random.uniform(kw, (1, 1), dtype=jnp.float32, minval=-1.0, maxval=1.0)
    bias = jax.random.uniform(kb, (1,), dtype=jnp.float32, minval=-1.0, maxval=1.0)

    out = linear_1x1(x, weight, bias)
    jax.block_until_ready(out)

    # Reference check in plain JAX.
    ref = x @ weight.T + bias
    assert out.shape == (50, 1)
    assert jnp.allclose(out, ref, atol=1e-6), "mismatch vs reference"

    print("KERNEL_OK")
</pallas_src>

<mosaic_0001>
module attributes {stable_mosaic.version = 11 : i64} {
  func.func @_linear_kernel(%arg0: i32, %arg1: memref<1x50xf32, #tpu.memory_space<vmem>>, %arg2: memref<2xf32, #tpu.memory_space<smem>>, %arg3: memref<1x50xf32, #tpu.memory_space<vmem>>) attributes {dimension_semantics = [#tpu.dimension_semantics<arbitrary>], iteration_bounds = array<i64: 1>, scalar_prefetch = 0 : i64, scratch_operands = 0 : i64, tpu.core_type = #tpu.core_type<tc>, window_params = [{pipeline_mode = #tpu.pipeline_mode<synchronous>, transform_indices = @transform_0, window_bounds = array<i64: 1, 50>}, {transform_indices = @transform_1, window_bounds = array<i64: 2>}, {pipeline_mode = #tpu.pipeline_mode<synchronous>, transform_indices = @transform_2, window_bounds = array<i64: 1, 50>}]} {
    %c0 = arith.constant 0 : index
    %0 = memref.load %arg2[%c0] : memref<2xf32, #tpu.memory_space<smem>>
    %c1 = arith.constant 1 : index
    %1 = memref.load %arg2[%c1] : memref<2xf32, #tpu.memory_space<smem>>
    %c0_0 = arith.constant 0 : index
    %c0_1 = arith.constant 0 : index
    %2 = vector.load %arg1[%c0_0, %c0_1] : memref<1x50xf32, #tpu.memory_space<vmem>>, vector<1x50xf32>
    %3 = vector.broadcast %0 : f32 to vector<1x50xf32>
    %4 = arith.mulf %2, %3 : vector<1x50xf32>
    %5 = vector.broadcast %1 : f32 to vector<1x50xf32>
    %6 = arith.addf %4, %5 : vector<1x50xf32>
    %c0_2 = arith.constant 0 : index
    %c0_3 = arith.constant 0 : index
    %7 = vector.load %arg3[%c0_2, %c0_3] : memref<1x50xf32, #tpu.memory_space<vmem>>, vector<1x50xf32>
    tpu.vector_store %arg3[%c0_2, %c0_3], %6 {strides = array<i32>} : memref<1x50xf32, #tpu.memory_space<vmem>>, vector<1x50xf32>,
    return
  }
  func.func @transform_0(%arg0: i32) -> (i32, i32) {
    %c0_i32 = arith.constant 0 : i32
    %c0_i32_0 = arith.constant 0 : i32
    %c0_i32_1 = arith.constant 0 : i32
    return %c0_i32, %c0_i32_0 : i32, i32
  }
  func.func @transform_1(%arg0: i32) -> i32 {
    %c0_i32 = arith.constant 0 : i32
    %c0_i32_0 = arith.constant 0 : i32
    return %c0_i32 : i32
  }
  func.func @transform_2(%arg0: i32) -> (i32, i32) {
    %c0_i32 = arith.constant 0 : i32
    %c0_i32_0 = arith.constant 0 : i32
    %c0_i32_1 = arith.constant 0 : i32
    return %c0_i32, %c0_i32_0 : i32, i32
  }
}

</mosaic_0001>

<llo_original>
// kernel: tpu_custom_call.1
$region0: #{tpu_custom_call.1}
  #allocation0 [shape = 'u32[]', space=smem, size = 0x4, offset = 0x4, fixed_abs, tag = 'smem constant byte address 0x4 - core index']
  #allocation1 [shape = 'u32[144,128]{1,0:T(1,128)}', space=vmem, size = 0x12000, scoped, tag = 'internal scratch']
  %s0 = inlined_call_operand.hbm [shape: f32[1,50], index: 0, kind: input, shape index: {}]
  %s1 = inlined_call_operand.vmem [shape: f32[2], index: 1, kind: input, shape index: {}]
  %s2 = inlined_call_operand.hbm [shape: f32[1,50], index: 2, kind: output, shape index: {}]
  %s3 = sld [smem:[#allocation0]]
  $region26: #{tpu_custom_call.1} parent=0
    _
  %s5 = ssub.s32 1, %s3
  %s6 = scalar_select 0, %s5, %s3
  $region1: #{tpu_custom_call.1} parent=0
    #allocation2 [shape = 'u8[512]{0}', space=vmem, size = 0x400, scoped, tag = 'input window, operand 0, single buffered']
    #allocation3 [shape = 's32[1]{0}', space=sflag, size = 0x4, scoped, tag = 'scoped memory for tpu_custom_call.1']
    #allocation4 [shape = 's32[1]{0}', space=sflag, size = 0x4, scoped, tag = 'scoped memory for tpu_custom_call.1']
    #allocation5 [shape = 's32[1]{0}', space=sflag, size = 0x4, scoped, tag = 'scoped memory for tpu_custom_call.1']
    #allocation6 [shape = 'u8[512]{0}', space=smem, size = 0x200, scoped, tag = 'input window, operand 1, single buffered']
    #allocation7 [shape = 'u8[512]{0}', space=vmem, size = 0x400, scoped, tag = 'output window, operand 0, single buffered']
    %7 = vsyncpa [#allocation3], 0
    %8 = vsyncpa [#allocation5], 0
    %9 = vsyncpa [#allocation4], 0
    // Predicated region
    $region2: #{tpu_custom_call.1} parent=1 // pred_check
      _
    $region3: #{tpu_custom_call.1} parent=1 // pred_check_branch
      %11 = sbr.rel (0) target = $region5
    $region4: #{tpu_custom_call.1} parent=1 // pred_region
      %s13 = ssub.s32 16, 16
      %14 = vsyncadd [#allocation3], %s13
      %s16 = sshll.u32 [#allocation2], 4
      %s17 = int_to_ptr.vmem [resolvable:$true] %s16
      %19 = dma.hbm_to_vmem [thread:$0]  %s0, 16, %s17, [#allocation3]
    $region5: #{tpu_custom_call.1} parent=1 // pred_fallthru
      _
    // Predicated region
    $region6: #{tpu_custom_call.1} parent=1 // pred_check
      _
    $region7: #{tpu_custom_call.1} parent=1 // pred_check_branch
      %21 = sbr.rel (0) target = $region9
    $region8: #{tpu_custom_call.1} parent=1 // pred_region
      %s23 = ssub.s32 16, 16
      %24 = vsyncadd [#allocation5], %s23
      %s26 = sshll.u32 %s1, 4
      %s27 = int_to_ptr.vmem [resolvable:$true] %s26
      %29 = dma.vmem_to_smem %s27, 16, [#allocation6], [#allocation5]
    $region9: #{tpu_custom_call.1} parent=1 // pred_fallthru
      _
    // Predicated region
    $region10: #{tpu_custom_call.1} parent=1 // pred_check
      _
    $region11: #{tpu_custom_call.1} parent=1 // pred_check_branch
      %31 = sbr.rel (0) target = $region13
    $region12: #{tpu_custom_call.1} parent=1 // pred_region
      %32 = dma.done [#allocation3], 16
    $region13: #{tpu_custom_call.1} parent=1 // pred_fallthru
      _
    // Predicated region
    $region14: #{tpu_custom_call.1} parent=1 // pred_check
      _
    $region15: #{tpu_custom_call.1} parent=1 // pred_check_branch
      %34 = sbr.rel (0) target = $region17
    $region16: #{tpu_custom_call.1} parent=1 // pred_region
      %35 = dma.done [#allocation5], 16
    $region17: #{tpu_custom_call.1} parent=1 // pred_fallthru
      _
    %36 = sfence
    %s37 = sld [smem:[#allocation6]]
    %s38 = sld [smem:[#allocation6 + $0x1]]
    %v39 = vld [vmem:[#allocation2] sm:$0x1]
    %v40 = vstv %s37
    %v41 = vmul.f32 %v39, %v40
    %v42 = vstv %s38
    %v43 = vadd.f32 %v41, %v42
    %vm44 = vcmask 401408
    %45 = vst.msk [vmem:[#allocation7] sm:$0x1] %vm44, %v43
    // Predicated region
    $region18: #{tpu_custom_call.1} parent=1 // pred_check
      _
    $region19: #{tpu_custom_call.1} parent=1 // pred_check_branch
      %47 = sbr.rel (0) target = $region21
    $region20: #{tpu_custom_call.1} parent=1 // pred_region
      %s49 = ssub.s32 16, 16
      %50 = vsyncadd [#allocation4], %s49
      %s52 = sshll.u32 [#allocation7], 4
      %s53 = int_to_ptr.vmem [resolvable:$true] %s52
      %55 = dma.vmem_to_hbm [thread:$0]  %s53, 16, %s2, [#allocation4]
    $region21: #{tpu_custom_call.1} parent=1 // pred_fallthru
      _
    // Predicated region
    $region22: #{tpu_custom_call.1} parent=1 // pred_check
      _
    $region23: #{tpu_custom_call.1} parent=1 // pred_check_branch
      %57 = sbr.rel (0) target = $region25
    $region24: #{tpu_custom_call.1} parent=1 // pred_region
      %58 = dma.done [#allocation4], 16
    $region25: #{tpu_custom_call.1} parent=1 // pred_fallthru
      _
    %59 = vsyncpa [#allocation3], 1
    %60 = vsyncpa [#allocation4], 1
    %61 = vsyncpa [#allocation5], 1

</llo_original>
